<compile_context>
chip_gen: v5e
topology: v5e:2x2
jax: 0.10.0
libtpu: 0.0.40
codegen_flags: <defaults>
</compile_context>

<pallas_src>
import functools

import jax
import jax.numpy as jnp
import numpy as np
from jax.experimental import pallas as pl
from jax.experimental.pallas import tpu as pltpu

LANE = 128      # lane width: pad every layer's output features to a multiple of this
TILE_B = 128    # batch rows per grid step; tiny VMEM footprint at these widths,
                # fits comfortably on v5e/v6e (128 MiB) and v7x (64 MiB).


def _round_up(x, m):
    return ((x + m - 1) // m) * m


# ----------------------------------------------------------------------------
# Parameter init (deterministic, mirrors layer_init: orthogonal weight * std,
# constant bias = 0). PyTorch orthogonal_ works on the [out, in] weight; build
# it that way, then transpose to [in, out] for the kernel.
# ----------------------------------------------------------------------------
def orthogonal(key, out_dim, in_dim, std):
    a = jax.random.normal(key, (out_dim, in_dim), dtype=jnp.float32)
    flip = out_dim < in_dim
    if flip:
        a = a.T
    q, r = jnp.linalg.qr(a)
    q = q * jnp.sign(jnp.diag(r))[None, :]
    if flip:
        q = q.T
    return (std * q).astype(jnp.float32)


def init_qnetwork_params(key, obs_dim, hidden, n_actions, num_hidden_layers):
    """Returns list of (W[in,out] f32, b[1,out] f32) for each Linear layer."""
    dims = [obs_dim] + [hidden] * (num_hidden_layers + 1) + [n_actions]
    stds = [np.sqrt(2)] * (num_hidden_layers + 1) + [1.0]
    params = []
    for din, dout, std in zip(dims[:-1], dims[1:], stds):
        key, sub = jax.random.split(key)
        w_torch = orthogonal(sub, dout, din, std)   # [out, in], like PyTorch
        w = w_torch.T                               # [in, out] for x @ W
        b = jnp.zeros((1, dout), dtype=jnp.float32)  # bias_const = 0.0
        params.append((w, b))
    return params


def prepare_params(params):
    """Zero-pad each layer's output features to a multiple of 128 (lane axis) and
    cast weights to bf16 for the MXU.  Exact for the forward pass: padded bias
    entries are 0, padded hidden activations are ReLU(0)=0, and the corresponding
    (padded) input rows of the next weight are 0, so they contribute nothing."""
    prepped = []
    prev_out_pad = None
    for i, (w, b) in enumerate(params):
        din, dout = w.shape
        din_pad = din if i == 0 else prev_out_pad
        dout_pad = _round_up(dout, LANE)
        w_p = jnp.zeros((din_pad, dout_pad), jnp.float32).at[:din, :dout].set(w)
        b_p = jnp.zeros((1, dout_pad), jnp.float32).at[:, :dout].set(b)
        prepped.append((w_p.astype(jnp.bfloat16), b_p))
        prev_out_pad = dout_pad
    return prepped


# ----------------------------------------------------------------------------
# Pallas kernel: fused MLP forward for one batch tile.
# Refs: x, W0, b0, W1, b1, ..., Wn, bn, out
# ----------------------------------------------------------------------------
def mlp_kernel(*refs, num_layers):
    x_ref = refs[0]
    o_ref = refs[-1]
    param_refs = refs[1:-1]

    h = x_ref[...]                                  # f32 [TILE_B, obs_dim]
    for i in range(num_layers):
        w = param_refs[2 * i][...]                  # bf16 [din_p, dout_p]
        b = param_refs[2 * i + 1][...]              # f32  [1, dout_p]
        acc = jnp.dot(h.astype(jnp.bfloat16), w,    # bf16 MXU operands, f32 acc
                      preferred_element_type=jnp.float32)
        h = acc + b                                 # elementwise kept in f32
        if i < num_layers - 1:                      # no activation after final layer
            h = jnp.maximum(h, 0.0)                 # ReLU
    o_ref[...] = h.astype(o_ref.dtype)              # lane-dense full-width store


def qnetwork_forward(x, params, *, tile_b=TILE_B):
    """x: [batch, obs_dim] f32 -> q: [batch, n_actions] f32."""
    num_layers = len(params)
    batch, obs_dim = x.shape
    n_actions = params[-1][0].shape[1]

    prepped = prepare_params(params)
    out_pad = prepped[-1][0].shape[1]

    batch_pad = _round_up(batch, tile_b)
    if batch_pad != batch:
        x = jnp.pad(x, ((0, batch_pad - batch), (0, 0)))
    num_tiles = batch_pad // tile_b

    flat_inputs = [x]
    in_specs = [pl.BlockSpec((tile_b, obs_dim), lambda i: (i, 0))]
    for (w, b) in prepped:
        flat_inputs.append(w)
        in_specs.append(pl.BlockSpec(w.shape, lambda i: (0, 0)))   # VMEM-resident
        flat_inputs.append(b)
        in_specs.append(pl.BlockSpec(b.shape, lambda i: (0, 0)))   # VMEM-resident

    out_shape = jax.ShapeDtypeStruct((batch_pad, out_pad), jnp.float32)
    out_spec = pl.BlockSpec((tile_b, out_pad), lambda i: (i, 0))

    flops = 2 * batch_pad * sum(int(w.shape[0]) * int(w.shape[1]) for w, _ in prepped)
    bytes_accessed = (
        x.size * x.dtype.itemsize
        + sum(w.size * w.dtype.itemsize + b.size * b.dtype.itemsize
              for w, b in prepped)
        + batch_pad * out_pad * 4
    )

    kernel = functools.partial(mlp_kernel, num_layers=num_layers)
    out_padded = pl.pallas_call(
        kernel,
        grid=(num_tiles,),
        in_specs=in_specs,
        out_specs=out_spec,
        out_shape=out_shape,
        compiler_params=pltpu.CompilerParams(
            dimension_semantics=("parallel",),      # megacore-shard batch on v7x
        ),
        cost_estimate=pl.CostEstimate(
            flops=flops, transcendentals=0, bytes_accessed=bytes_accessed),
    )(*flat_inputs)

    return out_padded[:batch, :n_actions]


# ----------------------------------------------------------------------------
# Pure-JAX reference (mimics the kernel's bf16-operand / f32-accumulate math).
# ----------------------------------------------------------------------------
def qnetwork_ref(x, params):
    h = x
    for i, (w, b) in enumerate(params):
        h = jnp.dot(h.astype(jnp.bfloat16), w.astype(jnp.bfloat16),
                    preferred_element_type=jnp.float32) + b
        if i < len(params) - 1:
            h = jnp.maximum(h, 0.0)
    return h


if __name__ == "__main__":
    # Small synthetic config consistent with the module:
    #   obs_dim = prod(single_observation_space.shape) = 16
    #   q_hidden_size = 32, q_num_hidden_layers = 2, single_action_space.n = 4
    # batch = 256 so the batch grid (TILE_B = 128) actually exercises 2 tiles.
    batch, obs_dim, hidden, n_actions, num_hidden_layers = 256, 16, 32, 4, 2

    key = jax.random.PRNGKey(0)
    key_x, key_p = jax.random.split(key)
    x = jax.random.normal(key_x, (batch, obs_dim), dtype=jnp.float32)
    params = init_qnetwork_params(key_p, obs_dim, hidden, n_actions,
                                  num_hidden_layers)

    q = qnetwork_forward(x, params)
    q = jax.block_until_ready(q)

    q_ref = qnetwork_ref(x, params)
    np.testing.assert_allclose(np.asarray(q), np.asarray(q_ref),
                               rtol=1e-3, atol=1e-3)

    print("KERNEL_OK")
</pallas_src>

<mosaic_0001>
module attributes {stable_mosaic.version = 11 : i64} {
  func.func @mlp_kernel(%arg0: i32, %arg1: memref<128x16xf32, #tpu.memory_space<vmem>>, %arg2: memref<16x128xbf16, #tpu.memory_space<vmem>>, %arg3: memref<1x128xf32, #tpu.memory_space<vmem>>, %arg4: memref<128x128xbf16, #tpu.memory_space<vmem>>, %arg5: memref<1x128xf32, #tpu.memory_space<vmem>>, %arg6: memref<128x128xbf16, #tpu.memory_space<vmem>>, %arg7: memref<1x128xf32, #tpu.memory_space<vmem>>, %arg8: memref<128x128xbf16, #tpu.memory_space<vmem>>, %arg9: memref<1x128xf32, #tpu.memory_space<vmem>>, %arg10: memref<128x128xf32, #tpu.memory_space<vmem>>) attributes {dimension_semantics = [#tpu.dimension_semantics<parallel>], iteration_bounds = array<i64: 2>, scalar_prefetch = 0 : i64, scratch_operands = 0 : i64, tpu.core_type = #tpu.core_type<tc>, window_params = [{transform_indices = @transform_0, window_bounds = array<i64: 128, 16>}, {pipeline_mode = #tpu.pipeline_mode<synchronous>, transform_indices = @transform_1, window_bounds = array<i64: 16, 128>}, {pipeline_mode = #tpu.pipeline_mode<synchronous>, transform_indices = @transform_2, window_bounds = array<i64: 1, 128>}, {pipeline_mode = #tpu.pipeline_mode<synchronous>, transform_indices = @transform_3, window_bounds = array<i64: 128, 128>}, {pipeline_mode = #tpu.pipeline_mode<synchronous>, transform_indices = @transform_4, window_bounds = array<i64: 1, 128>}, {pipeline_mode = #tpu.pipeline_mode<synchronous>, transform_indices = @transform_5, window_bounds = array<i64: 128, 128>}, {pipeline_mode = #tpu.pipeline_mode<synchronous>, transform_indices = @transform_6, window_bounds = array<i64: 1, 128>}, {pipeline_mode = #tpu.pipeline_mode<synchronous>, transform_indices = @transform_7, window_bounds = array<i64: 128, 128>}, {pipeline_mode = #tpu.pipeline_mode<synchronous>, transform_indices = @transform_8, window_bounds = array<i64: 1, 128>}, {transform_indices = @transform_9, window_bounds = array<i64: 128, 128>}]} {
    %c0 = arith.constant 0 : index
    %c0_0 = arith.constant 0 : index
    %0 = vector.load %arg1[%c0, %c0_0] : memref<128x16xf32, #tpu.memory_space<vmem>>, vector<128x16xf32>
    %c0_1 = arith.constant 0 : index
    %c0_2 = arith.constant 0 : index
    %1 = vector.load %arg2[%c0_1, %c0_2] : memref<16x128xbf16, #tpu.memory_space<vmem>>, vector<16x128xbf16>
    %c0_3 = arith.constant 0 : index
    %c0_4 = arith.constant 0 : index
    %2 = vector.load %arg3[%c0_3, %c0_4] : memref<1x128xf32, #tpu.memory_space<vmem>>, vector<1x128xf32>
    %3 = arith.truncf %0 : vector<128x16xf32> to vector<128x16xbf16>
    %cst = arith.constant dense<0.000000e+00> : vector<128x128xf32>
    %4 = tpu.matmul %3, %1, %cst {dimension_numbers = #tpu.dot_dimension_numbers<[1], [0], [0], [1], [0, 0, 1, 1], [], []>} : vector<128x16xbf16>, vector<16x128xbf16>, vector<128x128xf32> -> vector<128x128xf32>
    %5 = vector.broadcast %2 : vector<1x128xf32> to vector<128x128xf32>
    %6 = arith.addf %4, %5 : vector<128x128xf32>
    %cst_5 = arith.constant 0.000000e+00 : f32
    %7 = vector.broadcast %cst_5 : f32 to vector<128x128xf32>
    %8 = arith.maximumf %6, %7 : vector<128x128xf32>
    %c0_6 = arith.constant 0 : index
    %c0_7 = arith.constant 0 : index
    %9 = vector.load %arg4[%c0_6, %c0_7] : memref<128x128xbf16, #tpu.memory_space<vmem>>, vector<128x128xbf16>
    %c0_8 = arith.constant 0 : index
    %c0_9 = arith.constant 0 : index
    %10 = vector.load %arg5[%c0_8, %c0_9] : memref<1x128xf32, #tpu.memory_space<vmem>>, vector<1x128xf32>
    %11 = arith.truncf %8 : vector<128x128xf32> to vector<128x128xbf16>
    %cst_10 = arith.constant dense<0.000000e+00> : vector<128x128xf32>
    %12 = tpu.matmul %11, %9, %cst_10 {dimension_numbers = #tpu.dot_dimension_numbers<[1], [0], [0], [1], [0, 0, 1, 1], [], []>} : vector<128x128xbf16>, vector<128x128xbf16>, vector<128x128xf32> -> vector<128x128xf32>
    %13 = vector.broadcast %10 : vector<1x128xf32> to vector<128x128xf32>
    %14 = arith.addf %12, %13 : vector<128x128xf32>
    %cst_11 = arith.constant 0.000000e+00 : f32
    %15 = vector.broadcast %cst_11 : f32 to vector<128x128xf32>
    %16 = arith.maximumf %14, %15 : vector<128x128xf32>
    %c0_12 = arith.constant 0 : index
    %c0_13 = arith.constant 0 : index
    %17 = vector.load %arg6[%c0_12, %c0_13] : memref<128x128xbf16, #tpu.memory_space<vmem>>, vector<128x128xbf16>
    %c0_14 = arith.constant 0 : index
    %c0_15 = arith.constant 0 : index
    %18 = vector.load %arg7[%c0_14, %c0_15] : memref<1x128xf32, #tpu.memory_space<vmem>>, vector<1x128xf32>
    %19 = arith.truncf %16 : vector<128x128xf32> to vector<128x128xbf16>
    %cst_16 = arith.constant dense<0.000000e+00> : vector<128x128xf32>
    %20 = tpu.matmul %19, %17, %cst_16 {dimension_numbers = #tpu.dot_dimension_numbers<[1], [0], [0], [1], [0, 0, 1, 1], [], []>} : vector<128x128xbf16>, vector<128x128xbf16>, vector<128x128xf32> -> vector<128x128xf32>
    %21 = vector.broadcast %18 : vector<1x128xf32> to vector<128x128xf32>
    %22 = arith.addf %20, %21 : vector<128x128xf32>
    %cst_17 = arith.constant 0.000000e+00 : f32
    %23 = vector.broadcast %cst_17 : f32 to vector<128x128xf32>
    %24 = arith.maximumf %22, %23 : vector<128x128xf32>
    %c0_18 = arith.constant 0 : index
    %c0_19 = arith.constant 0 : index
    %25 = vector.load %arg8[%c0_18, %c0_19] : memref<128x128xbf16, #tpu.memory_space<vmem>>, vector<128x128xbf16>
    %c0_20 = arith.constant 0 : index
    %c0_21 = arith.constant 0 : index
    %26 = vector.load %arg9[%c0_20, %c0_21] : memref<1x128xf32, #tpu.memory_space<vmem>>, vector<1x128xf32>
    %27 = arith.truncf %24 : vector<128x128xf32> to vector<128x128xbf16>
    %cst_22 = arith.constant dense<0.000000e+00> : vector<128x128xf32>
    %28 = tpu.matmul %27, %25, %cst_22 {dimension_numbers = #tpu.dot_dimension_numbers<[1], [0], [0], [1], [0, 0, 1, 1], [], []>} : vector<128x128xbf16>, vector<128x128xbf16>, vector<128x128xf32> -> vector<128x128xf32>
    %29 = vector.broadcast %26 : vector<1x128xf32> to vector<128x128xf32>
    %30 = arith.addf %28, %29 : vector<128x128xf32>
    %c0_23 = arith.constant 0 : index
    %c0_24 = arith.constant 0 : index
    %31 = vector.load %arg10[%c0_23, %c0_24] : memref<128x128xf32, #tpu.memory_space<vmem>>, vector<128x128xf32>
    tpu.vector_store %arg10[%c0_23, %c0_24], %30 {strides = array<i32>} : memref<128x128xf32, #tpu.memory_space<vmem>>, vector<128x128xf32>,
    return
  }
  func.func @transform_0(%arg0: i32) -> (i32, i32) {
    %c0_i32 = arith.constant 0 : i32
    %c0_i32_0 = arith.constant 0 : i32
    return %arg0, %c0_i32 : i32, i32
  }
  func.func @transform_1(%arg0: i32) -> (i32, i32) {
    %c0_i32 = arith.constant 0 : i32
    %c0_i32_0 = arith.constant 0 : i32
    %c0_i32_1 = arith.constant 0 : i32
    return %c0_i32, %c0_i32_0 : i32, i32
  }
  func.func @transform_2(%arg0: i32) -> (i32, i32) {
    %c0_i32 = arith.constant 0 : i32
    %c0_i32_0 = arith.constant 0 : i32
    %c0_i32_1 = arith.constant 0 : i32
    return %c0_i32, %c0_i32_0 : i32, i32
  }
  func.func @transform_3(%arg0: i32) -> (i32, i32) {
    %c0_i32 = arith.constant 0 : i32
    %c0_i32_0 = arith.constant 0 : i32
    %c0_i32_1 = arith.constant 0 : i32
    return %c0_i32, %c0_i32_0 : i32, i32
  }
  func.func @transform_4(%arg0: i32) -> (i32, i32) {
    %c0_i32 = arith.constant 0 : i32
    %c0_i32_0 = arith.constant 0 : i32
    %c0_i32_1 = arith.constant 0 : i32
    return %c0_i32, %c0_i32_0 : i32, i32
  }
  func.func @transform_5(%arg0: i32) -> (i32, i32) {
    %c0_i32 = arith.constant 0 : i32
    %c0_i32_0 = arith.constant 0 : i32
    %c0_i32_1 = arith.constant 0 : i32
    return %c0_i32, %c0_i32_0 : i32, i32
  }
  func.func @transform_6(%arg0: i32) -> (i32, i32) {
    %c0_i32 = arith.constant 0 : i32
    %c0_i32_0 = arith.constant 0 : i32
    %c0_i32_1 = arith.constant 0 : i32
    return %c0_i32, %c0_i32_0 : i32, i32
  }
  func.func @transform_7(%arg0: i32) -> (i32, i32) {
    %c0_i32 = arith.constant 0 : i32
    %c0_i32_0 = arith.constant 0 : i32
    %c0_i32_1 = arith.constant 0 : i32
    return %c0_i32, %c0_i32_0 : i32, i32
  }
  func.func @transform_8(%arg0: i32) -> (i32, i32) {
    %c0_i32 = arith.constant 0 : i32
    %c0_i32_0 = arith.constant 0 : i32
    %c0_i32_1 = arith.constant 0 : i32
    return %c0_i32, %c0_i32_0 : i32, i32
  }
  func.func @transform_9(%arg0: i32) -> (i32, i32) {
    %c0_i32 = arith.constant 0 : i32
    %c0_i32_0 = arith.constant 0 : i32
    return %arg0, %c0_i32 : i32, i32
  }
}

</mosaic_0001>

<llo_original>
// kernel: tpu_custom_call.1
$region0: #{tpu_custom_call.1}
  #allocation0 [shape = 'u32[]', space=smem, size = 0x4, offset = 0x4, fixed_abs, tag = 'smem constant byte address 0x4 - core index']
  #allocation1 [shape = 'u32[72,128]{1,0:T(1,128)}', space=vmem, size = 0x9000, scoped, tag = 'internal scratch']
  %s0 = inlined_call_operand.vmem [shape: f32[256,16], index: 0, kind: input, shape index: {}]
  %s1 = inlined_call_operand.vmem [shape: bf16[16,128], index: 1, kind: input, shape index: {}]
  %s2 = inlined_call_operand.vmem [shape: f32[1,128], index: 2, kind: input, shape index: {}]
  %s3 = inlined_call_operand.vmem [shape: bf16[128,128], index: 3, kind: input, shape index: {}]
  %s4 = inlined_call_operand.vmem [shape: f32[1,128], index: 4, kind: input, shape index: {}]
  %s5 = inlined_call_operand.vmem [shape: bf16[128,128], index: 5, kind: input, shape index: {}]
  %s6 = inlined_call_operand.vmem [shape: f32[1,128], index: 6, kind: input, shape index: {}]
  %s7 = inlined_call_operand.vmem [shape: bf16[128,128], index: 7, kind: input, shape index: {}]
  %s8 = inlined_call_operand.vmem [shape: f32[1,128], index: 8, kind: input, shape index: {}]
  %s9 = inlined_call_operand.hbm [shape: f32[256,128], index: 9, kind: output, shape index: {}]
  %s10 = sld [smem:[#allocation0]]
  $region69: #{tpu_custom_call.1} parent=0
    _
  %s12 = ssub.s32 1, %s10
  %s13 = scalar_select 0, %s12, %s10
  $region1: #{tpu_custom_call.1} parent=0
    #allocation2 [shape = 'u8[131072]{0}', space=vmem, size = 0x20000, scoped, tag = 'output window, operand 0']
    #allocation3 [shape = 's32[2]{0}', space=sflag, size = 0x8, scoped, tag = 'scoped memory for tpu_custom_call.1']
    %14 = vsyncpa [#allocation3], 0
    %s15 = scalar_lea.sflag [#allocation3], 1
    %16 = vsyncpa %s15, 0
    loop: start=0, step=1, limit=4
    $region2: #{tpu_custom_call.1} parent=1 // loop_pre_header
      _
    $region3: #{tpu_custom_call.1} parent=1 // loop_header
      %s18 = sphi 0, %s22
      %p19 = scmp.ge.s32.totalorder %s18, 4
      %s28 = sphi 0, %s30
      %s31 = sphi 0, %s28
      %s32 = sphi 0, %s31
      %s48 = sphi 0, %s32
      %s52 = sphi 0, %s52
      %s54 = sphi 0, %s52
      %s55 = sphi 0, %s54
      %s69 = sphi 0, %s55
      %s73 = sphi 0, %s73
      %s75 = sphi 0, %s73
      %s76 = sphi 0, %s75
      %s90 = sphi 0, %s76
      %s94 = sphi 0, %s94
      %s96 = sphi 0, %s94
      %s97 = sphi 0, %s96
      %s111 = sphi 0, %s97
      %s115 = sphi 0, %s115
      %s117 = sphi 0, %s115
      %s118 = sphi 0, %s117
      %s132 = sphi 0, %s118
      %s136 = sphi 0, %s136
      %s138 = sphi 0, %s136
      %s139 = sphi 0, %s138
      %s153 = sphi 0, %s139
      %s157 = sphi 0, %s157
      %s159 = sphi 0, %s157
      %s160 = sphi 0, %s159
      %s174 = sphi 0, %s160
      %s178 = sphi 0, %s178
      %s180 = sphi 0, %s178
      %s181 = sphi 0, %s180
      %s195 = sphi 0, %s181
      %s199 = sphi 0, %s199
      %s201 = sphi 0, %s199
      %s202 = sphi 0, %s201
      %s216 = sphi 0, %s202
      %s222 = sphi 0, %s224
      %s225 = sphi 0, %s222
      %s226 = sphi 0, %s225
      %s242 = sphi 0, %s226
    $region4: #{tpu_custom_call.1} parent=1 // loop_header_branch
      %21 = sbr.rel (%p19) target = $region8
    $region5: #{tpu_custom_call.1} parent=1 // loop_body
      %s23 = ssub.s32 %s18, 1
      %s24 = ssub.s32 %s18, 2
      %s25 = sadd.s32 %s18, 1
      %s26 = ssub.s32 %s18, %s25
      %p27 = scmp.eq.s32.totalorder %s26, 0
      %s29 = sadd.s32 %s28, 1
      %s30 = scalar_select %p27, %s28, %s29
      %p33 = pneg %p27
      %p34 = scmp.eq.s32.totalorder %s18, 1
      %p35 = por %p33, %p34
      %p36 = scmp.ne.s32.totalorder %s28, %s31
      %p37 = scmp.eq.s32.totalorder %s18, 0
      %p38 = por %p36, %p37
      %p39 = scmp.ne.s32.totalorder %s28, %s31
      %p40 = scmp.eq.s32.totalorder %s23, 1
      %p41 = por %p39, %p40
      %p42 = scmp.ne.s32.totalorder %s31, %s32
      %p43 = scmp.eq.s32.totalorder %s23, 0
      %p44 = por %p42, %p43
      %p45 = scmp.ne.s32.totalorder %s31, %s32
      %p46 = scmp.eq.s32.totalorder %s24, 1
      %p47 = por %p45, %p46
      %p49 = scmp.ne.s32.totalorder %s32, %s48
      %p50 = scmp.eq.s32.totalorder %s24, 0
      %p51 = por %p49, %p50
      %s53 = sadd.s32 %s52, 1
      %p56 = scmp.eq.s32.totalorder %s18, 1
      %p57 = scmp.ne.s32.totalorder %s52, %s54
      %p58 = scmp.eq.s32.totalorder %s18, 0
      %p59 = por %p57, %p58
      %p60 = scmp.ne.s32.totalorder %s52, %s54
      %p61 = scmp.eq.s32.totalorder %s23, 1
      %p62 = por %p60, %p61
      %p63 = scmp.ne.s32.totalorder %s54, %s55
      %p64 = scmp.eq.s32.totalorder %s23, 0
      %p65 = por %p63, %p64
      %p66 = scmp.ne.s32.totalorder %s54, %s55
      %p67 = scmp.eq.s32.totalorder %s24, 1
      %p68 = por %p66, %p67
      %p70 = scmp.ne.s32.totalorder %s55, %s69
      %p71 = scmp.eq.s32.totalorder %s24, 0
      %p72 = por %p70, %p71
      %s74 = sadd.s32 %s73, 1
      %p77 = scmp.eq.s32.totalorder %s18, 1
      %p78 = scmp.ne.s32.totalorder %s73, %s75
      %p79 = scmp.eq.s32.totalorder %s18, 0
      %p80 = por %p78, %p79
      %p81 = scmp.ne.s32.totalorder %s73, %s75
      %p82 = scmp.eq.s32.totalorder %s23, 1
      %p83 = por %p81, %p82
      %p84 = scmp.ne.s32.totalorder %s75, %s76
      %p85 = scmp.eq.s32.totalorder %s23, 0
      %p86 = por %p84, %p85
      %p87 = scmp.ne.s32.totalorder %s75, %s76
      %p88 = scmp.eq.s32.totalorder %s24, 1
      %p89 = por %p87, %p88
      %p91 = scmp.ne.s32.totalorder %s76, %s90
      %p92 = scmp.eq.s32.totalorder %s24, 0
      %p93 = por %p91, %p92
      %s95 = sadd.s32 %s94, 1
      %p98 = scmp.eq.s32.totalorder %s18, 1
      %p99 = scmp.ne.s32.totalorder %s94, %s96
      %p100 = scmp.eq.s32.totalorder %s18, 0
      %p101 = por %p99, %p100
      %p102 = scmp.ne.s32.totalorder %s94, %s96
      %p103 = scmp.eq.s32.totalorder %s23, 1
      %p104 = por %p102, %p103
      %p105 = scmp.ne.s32.totalorder %s96, %s97
      %p106 = scmp.eq.s32.totalorder %s23, 0
      %p107 = por %p105, %p106
      %p108 = scmp.ne.s32.totalorder %s96, %s97
      %p109 = scmp.eq.s32.totalorder %s24, 1
      %p110 = por %p108, %p109
      %p112 = scmp.ne.s32.totalorder %s97, %s111
      %p113 = scmp.eq.s32.totalorder %s24, 0
      %p114 = por %p112, %p113
      %s116 = sadd.s32 %s115, 1
      %p119 = scmp.eq.s32.totalorder %s18, 1
      %p120 = scmp.ne.s32.totalorder %s115, %s117
      %p121 = scmp.eq.s32.totalorder %s18, 0
      %p122 = por %p120, %p121
      %p123 = scmp.ne.s32.totalorder %s115, %s117
      %p124 = scmp.eq.s32.totalorder %s23, 1
      %p125 = por %p123, %p124
      %p126 = scmp.ne.s32.totalorder %s117, %s118
      %p127 = scmp.eq.s32.totalorder %s23, 0
      %p128 = por %p126, %p127
      %p129 = scmp.ne.s32.totalorder %s117, %s118
      %p130 = scmp.eq.s32.totalorder %s24, 1
      %p131 = por %p129, %p130
      %p133 = scmp.ne.s32.totalorder %s118, %s132
      %p134 = scmp.eq.s32.totalorder %s24, 0
      %p135 = por %p133, %p134
      %s137 = sadd.s32 %s136, 1
      %p140 = scmp.eq.s32.totalorder %s18, 1
      %p141 = scmp.ne.s32.totalorder %s136, %s138
      %p142 = scmp.eq.s32.totalorder %s18, 0
      %p143 = por %p141, %p142
      %p144 = scmp.ne.s32.totalorder %s136, %s138
      %p145 = scmp.eq.s32.totalorder %s23, 1
      %p146 = por %p144, %p145
      %p147 = scmp.ne.s32.totalorder %s138, %s139
      %p148 = scmp.eq.s32.totalorder %s23, 0
      %p149 = por %p147, %p148
      %p150 = scmp.ne.s32.totalorder %s138, %s139
      %p151 = scmp.eq.s32.totalorder %s24, 1
      %p152 = por %p150, %p151
      %p154 = scmp.ne.s32.totalorder %s139, %s153
      %p155 = scmp.eq.s32.totalorder %s24, 0
      %p156 = por %p154, %p155
      %s158 = sadd.s32 %s157, 1
      %p161 = scmp.eq.s32.totalorder %s18, 1
      %p162 = scmp.ne.s32.totalorder %s157, %s159
      %p163 = scmp.eq.s32.totalorder %s18, 0
      %p164 = por %p162, %p163
      %p165 = scmp.ne.s32.totalorder %s157, %s159
      %p166 = scmp.eq.s32.totalorder %s23, 1
      %p167 = por %p165, %p166
      %p168 = scmp.ne.s32.totalorder %s159, %s160
      %p169 = scmp.eq.s32.totalorder %s23, 0
      %p170 = por %p168, %p169
      %p171 = scmp.ne.s32.totalorder %s159, %s160
      %p172 = scmp.eq.s32.totalorder %s24, 1
      %p173 = por %p171, %p172
      %p175 = scmp.ne.s32.totalorder %s160, %s174
      %p176 = scmp.eq.s32.totalorder %s24, 0
      %p177 = por %p175, %p176
      %s179 = sadd.s32 %s178, 1
      %p182 = scmp.eq.s32.totalorder %s18, 1
      %p183 = scmp.ne.s32.totalorder %s178, %s180
      %p184 = scmp.eq.s32.totalorder %s18, 0
      %p185 = por %p183, %p184
      %p186 = scmp.ne.s32.totalorder %s178, %s180
      %p187 = scmp.eq.s32.totalorder %s23, 1
      %p188 = por %p186, %p187
      %p189 = scmp.ne.s32.totalorder %s180, %s181
      %p190 = scmp.eq.s32.totalorder %s23, 0
      %p191 = por %p189, %p190
      %p192 = scmp.ne.s32.totalorder %s180, %s181
      %p193 = scmp.eq.s32.totalorder %s24, 1
      %p194 = por %p192, %p193
      %p196 = scmp.ne.s32.totalorder %s181, %s195
      %p197 = scmp.eq.s32.totalorder %s24, 0
      %p198 = por %p196, %p197
      %s200 = sadd.s32 %s199, 1
      %p203 = scmp.eq.s32.totalorder %s18, 1
      %p204 = scmp.ne.s32.totalorder %s199, %s201
      %p205 = scmp.eq.s32.totalorder %s18, 0
      %p206 = por %p204, %p205
      %p207 = scmp.ne.s32.totalorder %s199, %s201
      %p208 = scmp.eq.s32.totalorder %s23, 1
      %p209 = por %p207, %p208
      %p210 = scmp.ne.s32.totalorder %s201, %s202
      %p211 = scmp.eq.s32.totalorder %s23, 0
      %p212 = por %p210, %p211
      %p213 = scmp.ne.s32.totalorder %s201, %s202
      %p214 = scmp.eq.s32.totalorder %s24, 1
      %p215 = por %p213, %p214
      %p217 = scmp.ne.s32.totalorder %s202, %s216
      %p218 = scmp.eq.s32.totalorder %s24, 0
      %p219 = por %p217, %p218
      %s220 = ssub.s32 %s18, %s25
      %p221 = scmp.eq.s32.totalorder %s220, 0
      %s223 = sadd.s32 %s222, 1
      %s224 = scalar_select %p221, %s222, %s223
      %p227 = pneg %p221
      %p228 = scmp.eq.s32.totalorder %s18, 1
      %p229 = por %p227, %p228
      %p230 = scmp.ne.s32.totalorder %s222, %s225
      %p231 = scmp.eq.s32.totalorder %s18, 0
      %p232 = por %p230, %p231
      %p233 = scmp.ne.s32.totalorder %s222, %s225
      %p234 = scmp.eq.s32.totalorder %s23, 1
      %p235 = por %p233, %p234
      %p236 = scmp.ne.s32.totalorder %s225, %s226
      %p237 = scmp.eq.s32.totalorder %s23, 0
      %p238 = por %p236, %p237
      %p239 = scmp.ne.s32.totalorder %s225, %s226
      %p240 = scmp.eq.s32.totalorder %s24, 1
      %p241 = por %p239, %p240
      %p243 = scmp.ne.s32.totalorder %s226, %s242
      %p244 = scmp.eq.s32.totalorder %s24, 0
      %p245 = por %p243, %p244
      %p246 = scmp.le.s32.totalorder 1, %s18
      %p247 = scmp.lt.s32.totalorder %s18, 3
      %p248 = pnand %p246, %p247
      %p249 = pneg %p248
      // Predicated region
      $region9: #{tpu_custom_call.1} parent=5 // pred_check
        _
      $region10: #{tpu_custom_call.1} parent=5 // pred_check_branch
        %251 = sbr.rel (%p248) target = $region12
      $region11: #{tpu_custom_call.1} parent=5 // pred_region
        %s252 = ssub.s32 %s18, 1
        // Predicated region
        $region13: #{tpu_custom_call.1} parent=11 // pred_check
          %p253 = pneg %p65
        $region14: #{tpu_custom_call.1} parent=11 // pred_check_branch
          %255 = sbr.rel (%p253) target = $region16
        $region15: #{tpu_custom_call.1} parent=11 // pred_region
          _
        $region16: #{tpu_custom_call.1} parent=11 // pred_fallthru
          _
        // Predicated region
        $region17: #{tpu_custom_call.1} parent=11 // pred_check
          %p256 = pneg %p86
        $region18: #{tpu_custom_call.1} parent=11 // pred_check_branch
          %258 = sbr.rel (%p256) target = $region20
        $region19: #{tpu_custom_call.1} parent=11 // pred_region
          _
        $region20: #{tpu_custom_call.1} parent=11 // pred_fallthru
          _
        // Predicated region
        $region21: #{tpu_custom_call.1} parent=11 // pred_check
          %p259 = pneg %p107
        $region22: #{tpu_custom_call.1} parent=11 // pred_check_branch
          %261 = sbr.rel (%p259) target = $region24
        $region23: #{tpu_custom_call.1} parent=11 // pred_region
          _
        $region24: #{tpu_custom_call.1} parent=11 // pred_fallthru
          _
        // Predicated region
        $region25: #{tpu_custom_call.1} parent=11 // pred_check
          %p262 = pneg %p128
        $region26: #{tpu_custom_call.1} parent=11 // pred_check_branch
          %264 = sbr.rel (%p262) target = $region28
        $region27: #{tpu_custom_call.1} parent=11 // pred_region
          _
        $region28: #{tpu_custom_call.1} parent=11 // pred_fallthru
          _
        // Predicated region
        $region29: #{tpu_custom_call.1} parent=11 // pred_check
          %p265 = pneg %p149
        $region30: #{tpu_custom_call.1} parent=11 // pred_check_branch
          %267 = sbr.rel (%p265) target = $region32
        $region31: #{tpu_custom_call.1} parent=11 // pred_region
          _
        $region32: #{tpu_custom_call.1} parent=11 // pred_fallthru
          _
        // Predicated region
        $region33: #{tpu_custom_call.1} parent=11 // pred_check
          %p268 = pneg %p170
        $region34: #{tpu_custom_call.1} parent=11 // pred_check_branch
          %270 = sbr.rel (%p268) target = $region36
        $region35: #{tpu_custom_call.1} parent=11 // pred_region
          _
        $region36: #{tpu_custom_call.1} parent=11 // pred_fallthru
          _
        // Predicated region
        $region37: #{tpu_custom_call.1} parent=11 // pred_check
          %p271 = pneg %p191
        $region38: #{tpu_custom_call.1} parent=11 // pred_check_branch
          %273 = sbr.rel (%p271) target = $region40
        $region39: #{tpu_custom_call.1} parent=11 // pred_region
          _
        $region40: #{tpu_custom_call.1} parent=11 // pred_fallthru
          _
        // Predicated region
        $region41: #{tpu_custom_call.1} parent=11 // pred_check
          %p274 = pneg %p212
        $region42: #{tpu_custom_call.1} parent=11 // pred_check_branch
          %276 = sbr.rel (%p274) target = $region44
        $region43: #{tpu_custom_call.1} parent=11 // pred_region
          _
        $region44: #{tpu_custom_call.1} parent=11 // pred_fallthru
          _
      $region12: #{tpu_custom_call.1} parent=5 // pred_fallthru
        _
      %p277 = scmp.lt.s32.totalorder %s18, 2
      // Predicated region
      $region45: #{tpu_custom_call.1} parent=5 // pred_check
        %p278 = pneg %p277
      $region46: #{tpu_custom_call.1} parent=5 // pred_check_branch
        %280 = sbr.rel (%p278) target = $region48
      $region47: #{tpu_custom_call.1} parent=5 // pred_region
        // Predicated region
        $region49: #{tpu_custom_call.1} parent=47 // pred_check
          %p281 = pneg %p38
        $region50: #{tpu_custom_call.1} parent=47 // pred_check_branch
          %283 = sbr.rel (%p281) target = $region52
        $region51: #{tpu_custom_call.1} parent=47 // pred_region
          %s284 = smul.u32 16, %s18
          %p285 = scmp.lt.s32.totalorder %s284, 31
          %s286 = scalar_select %p285, %s284, 31
          %s287 = smul.addr %s286, 8
          %s288 = scalar_lea.vmem %s0, %s287
          %s289 = smul.u32 16, %s18
        $region52: #{tpu_custom_call.1} parent=47 // pred_fallthru
          _
      $region48: #{tpu_custom_call.1} parent=5 // pred_fallthru
        _
      %p290 = scmp.le.s32.totalorder 1, %s18
      %p291 = scmp.lt.s32.totalorder %s18, 3
      %p292 = pnand %p290, %p291
      %p293 = pneg %p292
      // Predicated region
      $region53: #{tpu_custom_call.1} parent=5 // pred_check
        _
      $region54: #{tpu_custom_call.1} parent=5 // pred_check_branch
        %295 = sbr.rel (%p292) target = $region56
      $region55: #{tpu_custom_call.1} parent=5 // pred_region
        %s296 = ssub.s32 %s18, 1
        %s297 = smul.u32 16, %s23
        %p298 = scmp.lt.s32.totalorder %s297, 31
        %s299 = scalar_select %p298, %s297, 31
        %s300 = smul.addr %s299, 8
        %s301 = scalar_lea.vmem %s0, %s300
        %p302 = pneg %p44
        %p303 = pneg %p41
        %p304 = pneg %p65
        %p305 = pneg %p62
        %p306 = pneg %p86
        %p307 = pneg %p83
        %p308 = pneg %p107
        %p309 = pneg %p104
        %p310 = pneg %p128
        %p311 = pneg %p125
        %p312 = pneg %p149
        %p313 = pneg %p146
        %p314 = pneg %p170
        %p315 = pneg %p167
        %p316 = pneg %p191
        %p317 = pneg %p188
        %p318 = pneg %p212
        %p319 = pneg %p209
        %p320 = pneg %p238
        %p321 = pneg %p235
        %s322 = sand.u32 %s225, 1
        %s323 = scalar_lea.sflag [#allocation3], %s322
        %s324 = sand.u32 %s225, 1
        %s325 = smul.addr %s324, 128
        %s326 = scalar_lea.vmem [#allocation2], %s325
        %s327 = smul.u32 16, %s23
        %p328 = scmp.lt.s32.totalorder %s327, 31
        %s329 = scalar_select %p328, %s327, 31
        %s330 = smul.addr %s329, 8
        %s331 = scalar_lea.vmem %s0, %s330
        %s332 = smul.u32 16, %s23
        %s333 = smul.u32 16, %s23
        %v335 = vld [vmem:[%s331] sm:$0xff]
        %v336 = vld [vmem:[%s331 + $0x8] sm:$0xff]
        %v337 = vld [vmem:[%s331 + $0x10] sm:$0xff]
        %v338 = vld [vmem:[%s331 + $0x18] sm:$0xff]
        %v339 = vld [vmem:[%s331 + $0x20] sm:$0xff]
        %v340 = vld [vmem:[%s331 + $0x28] sm:$0xff]
        %v341 = vld [vmem:[%s331 + $0x30] sm:$0xff]
        %v342 = vld [vmem:[%s331 + $0x38] sm:$0xff]
        %v343 = vld [vmem:[%s331 + $0x40] sm:$0xff]
        %v344 = vld [vmem:[%s331 + $0x48] sm:$0xff]
        %v345 = vld [vmem:[%s331 + $0x50] sm:$0xff]
        %v346 = vld [vmem:[%s331 + $0x58] sm:$0xff]
        %v347 = vld [vmem:[%s331 + $0x60] sm:$0xff]
        %v348 = vld [vmem:[%s331 + $0x68] sm:$0xff]
        %v349 = vld [vmem:[%s331 + $0x70] sm:$0xff]
        %v350 = vld [vmem:[%s331 + $0x78] sm:$0xff]
        %v351 = vld [vmem:[%s1] sm:$0xf]
        %v352 = vld [vmem:[%s1 + $0x4] sm:$0xf]
        %v353 = vld [vmem:[%s2] sm:$0x1]
        %v354 = vpack.c.bf16 %v336, %v335
        %v355 = vpack.c.bf16 %v338, %v337
        %v356 = vpack.c.bf16 %v340, %v339
        %v357 = vpack.c.bf16 %v342, %v341
        %v358 = vpack.c.bf16 %v344, %v343
        %v359 = vpack.c.bf16 %v346, %v345
        %v360 = vpack.c.bf16 %v348, %v347
        %v361 = vpack.c.bf16 %v350, %v349
        %v363 = vperm.slane %v353, 0
        %v367 = vunpack.c.l.b16 %v351
        %v368 = vunpack.c.l.b16 %v352
        %v369 = vpack.c.b16 %v368, %v367
        %vm371 = vcmask 130048
        %v373 = vsel %vm371, %v354, 0
        %v376 = vsel %vm371, %v355, 0
        %v379 = vsel %vm371, %v356, 0
        %v382 = vsel %vm371, %v357, 0
        %v385 = vsel %vm371, %v358, 0
        %v388 = vsel %vm371, %v359, 0
        %v391 = vsel %vm371, %v360, 0
        %v394 = vsel %vm371, %v361, 0
        %396 = vmatpush.bf16.msra.mxu0 0
        %397 = vmatpush.bf16.msra.mxu0 0
        %398 = vmatpush.bf16.msra.mxu0 0
        %399 = vmatpush.bf16.msra.mxu0 0
        %400 = vmatpush.bf16.msra.mxu0 0
        %401 = vmatpush.bf16.msra.mxu0 0
        %402 = vmatpush.bf16.msra.mxu0 0
        %403 = vmatpush.bf16.msra.mxu0 %v369
        %404 = vmatmul.bf16.gmra.mxu0 %v373
        %v405 = vpop.f32.mrf.mxu0
        %v406 = vadd.f32 %v363, %v405
        %v407 = vpop.f32.mrf.mxu0
        %v408 = vadd.f32 %v363, %v407
        %409 = vmatmul.bf16.gmra.mxu0 %v376
        %v410 = vpop.f32.mrf.mxu0
        %v411 = vadd.f32 %v363, %v410
        %v412 = vpop.f32.mrf.mxu0
        %v413 = vadd.f32 %v363, %v412
        %414 = vmatmul.bf16.gmra.mxu0 %v379
        %v415 = vpop.f32.mrf.mxu0
        %v416 = vadd.f32 %v363, %v415
        %v417 = vpop.f32.mrf.mxu0
        %v418 = vadd.f32 %v363, %v417
        %419 = vmatmul.bf16.gmra.mxu0 %v382
        %v420 = vpop.f32.mrf.mxu0
        %v421 = vadd.f32 %v363, %v420
        %v422 = vpop.f32.mrf.mxu0
        %v423 = vadd.f32 %v363, %v422
        %424 = vmatmul.bf16.gmra.mxu0 %v385
        %v425 = vpop.f32.mrf.mxu0
        %v426 = vadd.f32 %v363, %v425
        %v427 = vpop.f32.mrf.mxu0
        %v428 = vadd.f32 %v363, %v427
        %429 = vmatmul.bf16.gmra.mxu0 %v388
        %v430 = vpop.f32.mrf.mxu0
        %v431 = vadd.f32 %v363, %v430
        %v432 = vpop.f32.mrf.mxu0
        %v433 = vadd.f32 %v363, %v432
        %434 = vmatmul.bf16.gmra.mxu0 %v391
        %v435 = vpop.f32.mrf.mxu0
        %v436 = vadd.f32 %v363, %v435
        %v437 = vpop.f32.mrf.mxu0
        %v438 = vadd.f32 %v363, %v437
        %439 = vmatmul.bf16.gmra.mxu0 %v394
        %v440 = vpop.f32.mrf.mxu0
        %v441 = vadd.f32 %v363, %v440
        %v442 = vpop.f32.mrf.mxu0
        %v443 = vadd.f32 %v363, %v442
        %444 = vdwg.mxu0
        %v445 = vmax.f32 %v406, 0.0
        %v446 = vmax.f32 %v408, 0.0
        %v447 = vmax.f32 %v411, 0.0
        %v448 = vmax.f32 %v413, 0.0
        %v449 = vmax.f32 %v416, 0.0
        %v450 = vmax.f32 %v418, 0.0
        %v451 = vmax.f32 %v421, 0.0
        %v452 = vmax.f32 %v423, 0.0
        %v453 = vmax.f32 %v426, 0.0
        %v454 = vmax.f32 %v428, 0.0
        %v455 = vmax.f32 %v431, 0.0
        %v456 = vmax.f32 %v433, 0.0
        %v457 = vmax.f32 %v436, 0.0
        %v458 = vmax.f32 %v438, 0.0
        %v459 = vmax.f32 %v441, 0.0
        %v460 = vmax.f32 %v443, 0.0
        %v461 = vld [vmem:[%s3] sm:$0xf]
        %v462 = vld [vmem:[%s3 + $0x4] sm:$0xf]
        %v463 = vld [vmem:[%s3 + $0x8] sm:$0xf]
        %v464 = vld [vmem:[%s3 + $0xc] sm:$0xf]
        %v465 = vld [vmem:[%s3 + $0x10] sm:$0xf]
        %v466 = vld [vmem:[%s3 + $0x14] sm:$0xf]
        %v467 = vld [vmem:[%s3 + $0x18] sm:$0xf]
        %v468 = vld [vmem:[%s3 + $0x1c] sm:$0xf]
        %v469 = vld [vmem:[%s3 + $0x20] sm:$0xf]
        %v470 = vld [vmem:[%s3 + $0x24] sm:$0xf]
        %v471 = vld [vmem:[%s3 + $0x28] sm:$0xf]
        %v472 = vld [vmem:[%s3 + $0x2c] sm:$0xf]
        %v473 = vld [vmem:[%s3 + $0x30] sm:$0xf]
        %v474 = vld [vmem:[%s3 + $0x34] sm:$0xf]
        %v475 = vld [vmem:[%s3 + $0x38] sm:$0xf]
        %v476 = vld [vmem:[%s3 + $0x3c] sm:$0xf]
        %v477 = vld [vmem:[%s4] sm:$0x1]
        %v478 = vpack.c.bf16 %v446, %v445
        %v479 = vpack.c.bf16 %v448, %v447
        %v480 = vpack.c.bf16 %v450, %v449
        %v481 = vpack.c.bf16 %v452, %v451
        %v482 = vpack.c.bf16 %v454, %v453
        %v483 = vpack.c.bf16 %v456, %v455
        %v484 = vpack.c.bf16 %v458, %v457
        %v485 = vpack.c.bf16 %v460, %v459
        %v487 = vperm.slane %v477, 0
        %v505 = vunpack.c.l.b16 %v461
        %v506 = vunpack.c.l.b16 %v462
        %v507 = vunpack.c.l.b16 %v463
        %v508 = vunpack.c.l.b16 %v464
        %v509 = vunpack.c.l.b16 %v465
        %v510 = vunpack.c.l.b16 %v466
        %v511 = vunpack.c.l.b16 %v467
        %v512 = vunpack.c.l.b16 %v468
        %v513 = vunpack.c.l.b16 %v469
        %v514 = vunpack.c.l.b16 %v470
        %v515 = vunpack.c.l.b16 %v471
        %v516 = vunpack.c.l.b16 %v472
        %v517 = vunpack.c.l.b16 %v473
        %v518 = vunpack.c.l.b16 %v474
        %v519 = vunpack.c.l.b16 %v475
        %v520 = vunpack.c.l.b16 %v476
        %v521 = vpack.c.b16 %v506, %v505
        %v522 = vpack.c.b16 %v508, %v507
        %v523 = vpack.c.b16 %v510, %v509
        %v524 = vpack.c.b16 %v512, %v511
        %v525 = vpack.c.b16 %v514, %v513
        %v526 = vpack.c.b16 %v516, %v515
        %v527 = vpack.c.b16 %v518, %v517
        %v528 = vpack.c.b16 %v520, %v519
        %537 = vmatpush.bf16.msra.mxu0 %v528
        %538 = vmatpush.bf16.msra.mxu0 %v527
        %539 = vmatpush.bf16.msra.mxu0 %v526
        %540 = vmatpush.bf16.msra.mxu0 %v525
        %541 = vmatpush.bf16.msra.mxu0 %v524
        %542 = vmatpush.bf16.msra.mxu0 %v523
        %543 = vmatpush.bf16.msra.mxu0 %v522
        %544 = vmatpush.bf16.msra.mxu0 %v521
        %545 = vmatmul.bf16.gmra.mxu0 %v478
        %v546 = vpop.f32.mrf.mxu0
        %v547 = vadd.f32 %v487, %v546
        %v548 = vpop.f32.mrf.mxu0
        %v549 = vadd.f32 %v487, %v548
        %550 = vmatmul.bf16.gmra.mxu0 %v479
        %v551 = vpop.f32.mrf.mxu0
        %v552 = vadd.f32 %v487, %v551
        %v553 = vpop.f32.mrf.mxu0
        %v554 = vadd.f32 %v487, %v553
        %555 = vmatmul.bf16.gmra.mxu0 %v480
        %v556 = vpop.f32.mrf.mxu0
        %v557 = vadd.f32 %v487, %v556
        %v558 = vpop.f32.mrf.mxu0
        %v559 = vadd.f32 %v487, %v558
        %560 = vmatmul.bf16.gmra.mxu0 %v481
        %v561 = vpop.f32.mrf.mxu0
        %v562 = vadd.f32 %v487, %v561
        %v563 = vpop.f32.mrf.mxu0
        %v564 = vadd.f32 %v487, %v563
        %565 = vmatmul.bf16.gmra.mxu0 %v482
        %v566 = vpop.f32.mrf.mxu0
        %v567 = vadd.f32 %v487, %v566
        %v568 = vpop.f32.mrf.mxu0
        %v569 = vadd.f32 %v487, %v568
        %570 = vmatmul.bf16.gmra.mxu0 %v483
        %v571 = vpop.f32.mrf.mxu0
        %v572 = vadd.f32 %v487, %v571
        %v573 = vpop.f32.mrf.mxu0
        %v574 = vadd.f32 %v487, %v573
        %575 = vmatmul.bf16.gmra.mxu0 %v484
        %v576 = vpop.f32.mrf.mxu0
        %v577 = vadd.f32 %v487, %v576
        %v578 = vpop.f32.mrf.mxu0
        %v579 = vadd.f32 %v487, %v578
        %580 = vmatmul.bf16.gmra.mxu0 %v485
        %v581 = vpop.f32.mrf.mxu0
        %v582 = vadd.f32 %v487, %v581
        %v583 = vpop.f32.mrf.mxu0
        %v584 = vadd.f32 %v487, %v583
        %585 = vdwg.mxu0
        %v586 = vmax.f32 %v547, 0.0
        %v587 = vmax.f32 %v549, 0.0
        %v588 = vmax.f32 %v552, 0.0
        %v589 = vmax.f32 %v554, 0.0
        %v590 = vmax.f32 %v557, 0.0
        %v591 = vmax.f32 %v559, 0.0
        %v592 = vmax.f32 %v562, 0.0
        %v593 = vmax.f32 %v564, 0.0
        %v594 = vmax.f32 %v567, 0.0
        %v595 = vmax.f32 %v569, 0.0
        %v596 = vmax.f32 %v572, 0.0
        %v597 = vmax.f32 %v574, 0.0
        %v598 = vmax.f32 %v577, 0.0
        %v599 = vmax.f32 %v579, 0.0
        %v600 = vmax.f32 %v582, 0.0
        %v601 = vmax.f32 %v584, 0.0
        %v602 = vld [vmem:[%s5] sm:$0xf]
        %v603 = vld [vmem:[%s5 + $0x4] sm:$0xf]
        %v604 = vld [vmem:[%s5 + $0x8] sm:$0xf]
        %v605 = vld [vmem:[%s5 + $0xc] sm:$0xf]
        %v606 = vld [vmem:[%s5 + $0x10] sm:$0xf]
        %v607 = vld [vmem:[%s5 + $0x14] sm:$0xf]
        %v608 = vld [vmem:[%s5 + $0x18] sm:$0xf]
        %v609 = vld [vmem:[%s5 + $0x1c] sm:$0xf]
        %v610 = vld [vmem:[%s5 + $0x20] sm:$0xf]
        %v611 = vld [vmem:[%s5 + $0x24] sm:$0xf]
        %v612 = vld [vmem:[%s5 + $0x28] sm:$0xf]
        %v613 = vld [vmem:[%s5 + $0x2c] sm:$0xf]
        %v614 = vld [vmem:[%s5 + $0x30] sm:$0xf]
        %v615 = vld [vmem:[%s5 + $0x34] sm:$0xf]
        %v616 = vld [vmem:[%s5 + $0x38] sm:$0xf]
        %v617 = vld [vmem:[%s5 + $0x3c] sm:$0xf]
        %v618 = vld [vmem:[%s6] sm:$0x1]
        %v619 = vpack.c.bf16 %v587, %v586
        %v620 = vpack.c.bf16 %v589, %v588
        %v621 = vpack.c.bf16 %v591, %v590
        %v622 = vpack.c.bf16 %v593, %v592
        %v623 = vpack.c.bf16 %v595, %v594
        %v624 = vpack.c.bf16 %v597, %v596
        %v625 = vpack.c.bf16 %v599, %v598
        %v626 = vpack.c.bf16 %v601, %v600
        %v628 = vperm.slane %v618, 0
        %v646 = vunpack.c.l.b16 %v602
        %v647 = vunpack.c.l.b16 %v603
        %v648 = vunpack.c.l.b16 %v604
        %v649 = vunpack.c.l.b16 %v605
        %v650 = vunpack.c.l.b16 %v606
        %v651 = vunpack.c.l.b16 %v607
        %v652 = vunpack.c.l.b16 %v608
        %v653 = vunpack.c.l.b16 %v609
        %v654 = vunpack.c.l.b16 %v610
        %v655 = vunpack.c.l.b16 %v611
        %v656 = vunpack.c.l.b16 %v612
        %v657 = vunpack.c.l.b16 %v613
        %v658 = vunpack.c.l.b16 %v614
        %v659 = vunpack.c.l.b16 %v615
        %v660 = vunpack.c.l.b16 %v616
        %v661 = vunpack.c.l.b16 %v617
        %v662 = vpack.c.b16 %v647, %v646
        %v663 = vpack.c.b16 %v649, %v648
        %v664 = vpack.c.b16 %v651, %v650
        %v665 = vpack.c.b16 %v653, %v652
        %v666 = vpack.c.b16 %v655, %v654
        %v667 = vpack.c.b16 %v657, %v656
        %v668 = vpack.c.b16 %v659, %v658
        %v669 = vpack.c.b16 %v661, %v660
        %678 = vmatpush.bf16.msra.mxu0 %v669
        %679 = vmatpush.bf16.msra.mxu0 %v668
        %680 = vmatpush.bf16.msra.mxu0 %v667
        %681 = vmatpush.bf16.msra.mxu0 %v666
        %682 = vmatpush.bf16.msra.mxu0 %v665
        %683 = vmatpush.bf16.msra.mxu0 %v664
        %684 = vmatpush.bf16.msra.mxu0 %v663
        %685 = vmatpush.bf16.msra.mxu0 %v662
        %686 = vmatmul.bf16.gmra.mxu0 %v619
        %v687 = vpop.f32.mrf.mxu0
        %v688 = vadd.f32 %v628, %v687
        %v689 = vpop.f32.mrf.mxu0
        %v690 = vadd.f32 %v628, %v689
        %691 = vmatmul.bf16.gmra.mxu0 %v620
        %v692 = vpop.f32.mrf.mxu0
        %v693 = vadd.f32 %v628, %v692
        %v694 = vpop.f32.mrf.mxu0
        %v695 = vadd.f32 %v628, %v694
        %696 = vmatmul.bf16.gmra.mxu0 %v621
        %v697 = vpop.f32.mrf.mxu0
        %v698 = vadd.f32 %v628, %v697
        %v699 = vpop.f32.mrf.mxu0
        %v700 = vadd.f32 %v628, %v699
        %701 = vmatmul.bf16.gmra.mxu0 %v622
        %v702 = vpop.f32.mrf.mxu0
        %v703 = vadd.f32 %v628, %v702
        %v704 = vpop.f32.mrf.mxu0
        %v705 = vadd.f32 %v628, %v704
        %706 = vmatmul.bf16.gmra.mxu0 %v623
        %v707 = vpop.f32.mrf.mxu0
        %v708 = vadd.f32 %v628, %v707
        %v709 = vpop.f32.mrf.mxu0
        %v710 = vadd.f32 %v628, %v709
        %711 = vmatmul.bf16.gmra.mxu0 %v624
        %v712 = vpop.f32.mrf.mxu0
        %v713 = vadd.f32 %v628, %v712
        %v714 = vpop.f32.mrf.mxu0
        %v715 = vadd.f32 %v628, %v714
        %716 = vmatmul.bf16.gmra.mxu0 %v625
        %v717 = vpop.f32.mrf.mxu0
        %v718 = vadd.f32 %v628, %v717
        %v719 = vpop.f32.mrf.mxu0
        %v720 = vadd.f32 %v628, %v719
        %721 = vmatmul.bf16.gmra.mxu0 %v626
        %v722 = vpop.f32.mrf.mxu0
        %v723 = vadd.f32 %v628, %v722
        %v724 = vpop.f32.mrf.mxu0
        %v725 = vadd.f32 %v628, %v724
        %726 = vdwg.mxu0
        %v727 = vmax.f32 %v688, 0.0
        %v728 = vmax.f32 %v690, 0.0
        %v729 = vmax.f32 %v693, 0.0
        %v730 = vmax.f32 %v695, 0.0
        %v731 = vmax.f32 %v698, 0.0
        %v732 = vmax.f32 %v700, 0.0
        %v733 = vmax.f32 %v703, 0.0
        %v734 = vmax.f32 %v705, 0.0
        %v735 = vmax.f32 %v708, 0.0
        %v736 = vmax.f32 %v710, 0.0
        %v737 = vmax.f32 %v713, 0.0
        %v738 = vmax.f32 %v715, 0.0
        %v739 = vmax.f32 %v718, 0.0
        %v740 = vmax.f32 %v720, 0.0
        %v741 = vmax.f32 %v723, 0.0
        %v742 = vmax.f32 %v725, 0.0
        %v743 = vld [vmem:[%s7] sm:$0xf]
        %v744 = vld [vmem:[%s7 + $0x4] sm:$0xf]
        %v745 = vld [vmem:[%s7 + $0x8] sm:$0xf]
        %v746 = vld [vmem:[%s7 + $0xc] sm:$0xf]
        %v747 = vld [vmem:[%s7 + $0x10] sm:$0xf]
        %v748 = vld [vmem:[%s7 + $0x14] sm:$0xf]
        %v749 = vld [vmem:[%s7 + $0x18] sm:$0xf]
        %v750 = vld [vmem:[%s7 + $0x1c] sm:$0xf]
        %v751 = vld [vmem:[%s7 + $0x20] sm:$0xf]
        %v752 = vld [vmem:[%s7 + $0x24] sm:$0xf]
        %v753 = vld [vmem:[%s7 + $0x28] sm:$0xf]
        %v754 = vld [vmem:[%s7 + $0x2c] sm:$0xf]
        %v755 = vld [vmem:[%s7 + $0x30] sm:$0xf]
        %v756 = vld [vmem:[%s7 + $0x34] sm:$0xf]
        %v757 = vld [vmem:[%s7 + $0x38] sm:$0xf]
        %v758 = vld [vmem:[%s7 + $0x3c] sm:$0xf]
        %v759 = vld [vmem:[%s8] sm:$0x1]
        %v760 = vpack.c.bf16 %v728, %v727
        %v761 = vpack.c.bf16 %v730, %v729
        %v762 = vpack.c.bf16 %v732, %v731
        %v763 = vpack.c.bf16 %v734, %v733
        %v764 = vpack.c.bf16 %v736, %v735
        %v765 = vpack.c.bf16 %v738, %v737
        %v766 = vpack.c.bf16 %v740, %v739
        %v767 = vpack.c.bf16 %v742, %v741
        %v769 = vperm.slane %v759, 0
        %v787 = vunpack.c.l.b16 %v743
        %v788 = vunpack.c.l.b16 %v744
        %v789 = vunpack.c.l.b16 %v745
        %v790 = vunpack.c.l.b16 %v746
        %v791 = vunpack.c.l.b16 %v747
        %v792 = vunpack.c.l.b16 %v748
        %v793 = vunpack.c.l.b16 %v749
        %v794 = vunpack.c.l.b16 %v750
        %v795 = vunpack.c.l.b16 %v751
        %v796 = vunpack.c.l.b16 %v752
        %v797 = vunpack.c.l.b16 %v753
        %v798 = vunpack.c.l.b16 %v754
        %v799 = vunpack.c.l.b16 %v755
        %v800 = vunpack.c.l.b16 %v756
        %v801 = vunpack.c.l.b16 %v757
        %v802 = vunpack.c.l.b16 %v758
        %v803 = vpack.c.b16 %v788, %v787
        %v804 = vpack.c.b16 %v790, %v789
        %v805 = vpack.c.b16 %v792, %v791
        %v806 = vpack.c.b16 %v794, %v793
        %v807 = vpack.c.b16 %v796, %v795
        %v808 = vpack.c.b16 %v798, %v797
        %v809 = vpack.c.b16 %v800, %v799
        %v810 = vpack.c.b16 %v802, %v801
        %819 = vmatpush.bf16.msra.mxu0 %v810
        %820 = vmatpush.bf16.msra.mxu0 %v809
        %821 = vmatpush.bf16.msra.mxu0 %v808
        %822 = vmatpush.bf16.msra.mxu0 %v807
        %823 = vmatpush.bf16.msra.mxu0 %v806
        %824 = vmatpush.bf16.msra.mxu0 %v805
        %825 = vmatpush.bf16.msra.mxu0 %v804
        %826 = vmatpush.bf16.msra.mxu0 %v803
        %827 = vmatmul.bf16.gmra.mxu0 %v760
        %v828 = vpop.f32.mrf.mxu0
        %v829 = vadd.f32 %v769, %v828
        %v830 = vpop.f32.mrf.mxu0
        %v831 = vadd.f32 %v769, %v830
        %832 = vmatmul.bf16.gmra.mxu0 %v761
        %v833 = vpop.f32.mrf.mxu0
        %v834 = vadd.f32 %v769, %v833
        %v835 = vpop.f32.mrf.mxu0
        %v836 = vadd.f32 %v769, %v835
        %837 = vmatmul.bf16.gmra.mxu0 %v762
        %v838 = vpop.f32.mrf.mxu0
        %v839 = vadd.f32 %v769, %v838
        %v840 = vpop.f32.mrf.mxu0
        %v841 = vadd.f32 %v769, %v840
        %842 = vmatmul.bf16.gmra.mxu0 %v763
        %v843 = vpop.f32.mrf.mxu0
        %v844 = vadd.f32 %v769, %v843
        %v845 = vpop.f32.mrf.mxu0
        %v846 = vadd.f32 %v769, %v845
        %847 = vmatmul.bf16.gmra.mxu0 %v764
        %v848 = vpop.f32.mrf.mxu0
        %v849 = vadd.f32 %v769, %v848
        %v850 = vpop.f32.mrf.mxu0
        %v851 = vadd.f32 %v769, %v850
        %852 = vmatmul.bf16.gmra.mxu0 %v765
        %v853 = vpop.f32.mrf.mxu0
        %v854 = vadd.f32 %v769, %v853
        %v855 = vpop.f32.mrf.mxu0
        %v856 = vadd.f32 %v769, %v855
        %857 = vmatmul.bf16.gmra.mxu0 %v766
        %v858 = vpop.f32.mrf.mxu0
        %v859 = vadd.f32 %v769, %v858
        %v860 = vpop.f32.mrf.mxu0
        %v861 = vadd.f32 %v769, %v860
        %862 = vmatmul.bf16.gmra.mxu0 %v767
        %v863 = vpop.f32.mrf.mxu0
        %v864 = vadd.f32 %v769, %v863
        %v865 = vpop.f32.mrf.mxu0
        %v866 = vadd.f32 %v769, %v865
        %867 = vdwg.mxu0
        %868 = vst [vmem:[%s326] sm:$0xff] %v829
        %869 = vst [vmem:[%s326 + $0x8] sm:$0xff] %v831
        %870 = vst [vmem:[%s326 + $0x10] sm:$0xff] %v834
        %871 = vst [vmem:[%s326 + $0x18] sm:$0xff] %v836
        %872 = vst [vmem:[%s326 + $0x20] sm:$0xff] %v839
        %873 = vst [vmem:[%s326 + $0x28] sm:$0xff] %v841
        %874 = vst [vmem:[%s326 + $0x30] sm:$0xff] %v844
        %875 = vst [vmem:[%s326 + $0x38] sm:$0xff] %v846
        %876 = vst [vmem:[%s326 + $0x40] sm:$0xff] %v849
        %877 = vst [vmem:[%s326 + $0x48] sm:$0xff] %v851
        %878 = vst [vmem:[%s326 + $0x50] sm:$0xff] %v854
        %879 = vst [vmem:[%s326 + $0x58] sm:$0xff] %v856
        %880 = vst [vmem:[%s326 + $0x60] sm:$0xff] %v859
        %881 = vst [vmem:[%s326 + $0x68] sm:$0xff] %v861
        %882 = vst [vmem:[%s326 + $0x70] sm:$0xff] %v864
        %883 = vst [vmem:[%s326 + $0x78] sm:$0xff] %v866
        %s884 = sand.u32 %s225, 1
        %s885 = scalar_lea.sflag [#allocation3], %s884
        %s886 = sand.u32 %s225, 1
        %s887 = smul.addr %s886, 128
        %s888 = scalar_lea.vmem [#allocation2], %s887
        // Predicated region
        $region57: #{tpu_custom_call.1} parent=55 // pred_check
          %p889 = pneg %p235
        $region58: #{tpu_custom_call.1} parent=55 // pred_check_branch
          %891 = sbr.rel (%p889) target = $region60
        $region59: #{tpu_custom_call.1} parent=55 // pred_region
          %s892 = smul.u32 16, %s23
          %894 = vsyncadd %s885, 0
          %s895 = smul.addr %s892, 8
          %s896 = scalar_lea.hbm %s9, %s895
          %s897 = sshll.u32 %s888, 4
          %s898 = int_to_ptr.vmem [resolvable:$true] %s897
          %s899 = sshll.u32 %s896, 4
          %s900 = int_to_ptr.hbm [resolvable:$true] %s899
          %905 = dma.vmem_to_hbm [thread:$0]  %s898, 2048, %s900, %s885, 128, 128, 8
        $region60: #{tpu_custom_call.1} parent=55 // pred_fallthru
          _
      $region56: #{tpu_custom_call.1} parent=5 // pred_fallthru
        _
      %p906 = scmp.le.s32.totalorder 2, %s18
      // Predicated region
      $region61: #{tpu_custom_call.1} parent=5 // pred_check
        %p907 = pneg %p906
      $region62: #{tpu_custom_call.1} parent=5 // pred_check_branch
        %909 = sbr.rel (%p907) target = $region64
      $region63: #{tpu_custom_call.1} parent=5 // pred_region
        %s910 = ssub.s32 %s18, 2
        // Predicated region
        $region65: #{tpu_custom_call.1} parent=63 // pred_check
          %p911 = pneg %p241
        $region66: #{tpu_custom_call.1} parent=63 // pred_check_branch
          %913 = sbr.rel (%p911) target = $region68
        $region67: #{tpu_custom_call.1} parent=63 // pred_region
          %s914 = sand.u32 %s226, 1
          %s915 = scalar_lea.sflag [#allocation3], %s914
          %s916 = sand.u32 %s226, 1
          %s917 = smul.addr %s916, 128
          %s918 = scalar_lea.vmem [#allocation2], %s917
          %920 = dma.done %s915, 2048
        $region68: #{tpu_custom_call.1} parent=63 // pred_fallthru
          _
      $region64: #{tpu_custom_call.1} parent=5 // pred_fallthru
        _
    $region6: #{tpu_custom_call.1} parent=1 // loop_footer
      %s22 = sadd.s32 1, %s18
    $region7: #{tpu_custom_call.1} parent=1 // loop_footer_branch
      %17 = sbr.rel target = $region3
    $region8: #{tpu_custom_call.1} parent=1 // loop_exit
      _
    %921 = vsyncpa [#allocation3], 1
    %s922 = scalar_lea.sflag [#allocation3], 1
    %923 = vsyncpa %s922, 1

</llo_original>
